<compile_context>
chip_gen: v7x
topology: tpu7x:2x2x1
jax: 0.10.0
libtpu: 0.0.40
codegen_flags: <defaults>
</compile_context>

<pallas_src>
import functools

import jax
import jax.numpy as jnp
from jax.experimental import pallas as pl
from jax.experimental.pallas import tpu as pltpu


def _round_up(x, m):
    return -(-x // m) * m


def _at_loss_kernel(s_ref, t_ref, out_ref, s_acc, t_acc, *, inv_c):
    """One grid step over (TB, C_blk, HW) slabs of student/teacher features.

    Grid = (batch blocks, channel blocks); the channel axis (last) is the
    reduction axis.  Channel-summed squared activations are accumulated per
    sample in VMEM scratch; at the final channel step the per-sample
    attention-transfer loss (sum over HW of the squared difference of the
    L2-normalized attention maps) is written to the per-block output.
    """
    c = pl.program_id(1)

    @pl.when(c == 0)
    def _():
        s_acc[...] = jnp.zeros_like(s_acc)
        t_acc[...] = jnp.zeros_like(t_acc)

    s = s_ref[...].astype(jnp.float32)        # (TB, C_blk, HW)
    t = t_ref[...].astype(jnp.float32)
    s_acc[...] += jnp.sum(s * s, axis=1)      # (TB, HW) partial channel sums
    t_acc[...] += jnp.sum(t * t, axis=1)

    @pl.when(c == pl.num_programs(1) - 1)
    def _():
        eps = jnp.float32(1e-12)
        s_att = s_acc[...] * jnp.float32(inv_c)   # mean over channels, (TB, HW)
        t_att = t_acc[...] * jnp.float32(inv_c)
        ss = jnp.sum(s_att * s_att, axis=-1, keepdims=True)   # (TB, 1)
        tt = jnp.sum(t_att * t_att, axis=-1, keepdims=True)
        st = jnp.sum(s_att * t_att, axis=-1, keepdims=True)
        inv_s = pl.reciprocal(jnp.maximum(jnp.sqrt(ss), eps), approx=False)
        inv_t = pl.reciprocal(jnp.maximum(jnp.sqrt(tt), eps), approx=False)
        # sum_HW (s_att/max(||s_att||,eps) - t_att/max(||t_att||,eps))^2,
        # exact algebraic closed form (matches F.normalize semantics).
        per_sample = (ss * inv_s * inv_s + tt * inv_t * inv_t
                      - 2.0 * st * inv_s * inv_t)             # (TB, 1)
        out_ref[...] = per_sample.reshape(out_ref.shape)


def _choose_tiles(N, C, HW, itemsize):
    """Pick (batch_tile, channel_tile) so one step's double-buffered input
    DMAs stay within a VMEM budget that is safe on every TPU generation."""
    hw_pad = _round_up(HW, 128)
    budget = 32 * 1024 * 1024   # 2 inputs x 2 pipeline buffers per step

    def in_bytes(tb, cb):
        return 4 * tb * max(cb, 8) * hw_pad * itemsize

    # Prefer whole-sample blocks with as many samples per step as fit.
    for tb in range(N, 0, -1):
        if N % tb == 0 and in_bytes(tb, C) <= budget:
            return tb, C
    # A single (C, HW) slab is too big: tile the channel (reduction) axis.
    # Partial channel tiles must be a multiple of 8 sublanes (or the full C).
    legal = [d for d in range(1, C + 1) if C % d == 0 and (d % 8 == 0 or d == C)]
    fitting = [d for d in legal if in_bytes(1, d) <= budget]
    return 1, (max(fitting) if fitting else min(legal))


def _nearest_resize_nchw(x, size):
    """Match torch.nn.functional.interpolate(mode='nearest') for NCHW."""
    N, C, H, W = x.shape
    Hs, Ws = size
    ih = (jnp.arange(Hs) * H) // Hs
    iw = (jnp.arange(Ws) * W) // Ws
    # TODO(synk): for integer downscale factors this resize could be folded
    # into the teacher BlockSpec index_map to avoid materializing a copy in HBM.
    return x[:, :, ih[:, None], iw[None, :]]


def at_loss(s_feature, t_feature, loss_weight=1.0):
    """Pallas TPU implementation of ATLoss.forward.

    s_feature, t_feature: (N, C, H, W) float (f32 or bf16) arrays, NCHW layout.
    Returns a scalar float32 loss.
    """
    if s_feature.shape[2:] != t_feature.shape[2:]:
        t_feature = _nearest_resize_nchw(t_feature, s_feature.shape[2:])

    N, C, H, W = s_feature.shape
    HW = H * W
    itemsize = jnp.dtype(s_feature.dtype).itemsize

    # Lane-dense layout: free metadata reshape on contiguous NCHW.
    s2 = s_feature.reshape(N, C, HW)
    t2 = t_feature.reshape(N, C, HW)

    TB, C_blk = _choose_tiles(N, C, HW, itemsize)
    nb = N // TB
    nc = C // C_blk

    hw_pad = _round_up(HW, 128)
    in_vmem = 4 * TB * max(C_blk, 8) * hw_pad * itemsize        # 2 in x 2 bufs
    scratch_vmem = 2 * max(TB, 8) * hw_pad * 4
    vmem_limit = int(max(48 * 1024 * 1024, (in_vmem + scratch_vmem) * 3 // 2))

    kernel = functools.partial(_at_loss_kernel, inv_c=1.0 / C)

    per_sample = pl.pallas_call(
        kernel,
        out_shape=jax.ShapeDtypeStruct((nb, TB, 1), jnp.float32),
        grid_spec=pltpu.PrefetchScalarGridSpec(
            num_scalar_prefetch=0,
            grid=(nb, nc),
            in_specs=[
                pl.BlockSpec((TB, C_blk, HW), lambda b, c: (b, c, 0)),
                pl.BlockSpec((TB, C_blk, HW), lambda b, c: (b, c, 0)),
            ],
            out_specs=pl.BlockSpec((1, TB, 1), lambda b, c: (b, 0, 0)),
            scratch_shapes=[
                pltpu.VMEM((TB, HW), jnp.float32),
                pltpu.VMEM((TB, HW), jnp.float32),
            ],
        ),
        compiler_params=pltpu.CompilerParams(
            # Batch blocks are independent (v7x dual-TC sharding); the channel
            # axis is a sequential reduction.
            dimension_semantics=("parallel", "arbitrary"),
            vmem_limit_bytes=vmem_limit,
        ),
        cost_estimate=pl.CostEstimate(
            flops=int(6 * N * C * HW),
            transcendentals=int(4 * N),
            bytes_accessed=int(2 * N * C * HW * itemsize + N * 4),
        ),
    )(s2, t2)

    # loss = loss_weight * mean over the (N, H*W) diff^2 matrix.
    return (jnp.float32(loss_weight) * jnp.sum(per_sample)) / jnp.float32(N * HW)


def at_loss_ref(s_feature, t_feature, loss_weight=1.0):
    """Pure-JAX reference mirroring the PyTorch module."""
    if s_feature.shape[2:] != t_feature.shape[2:]:
        t_feature = _nearest_resize_nchw(t_feature, s_feature.shape[2:])

    def calc_att(x):
        att = jnp.mean(x.astype(jnp.float32) ** 2, axis=1)   # (N, H, W)
        att = att.reshape(att.shape[0], -1)                   # (N, H*W)
        norm = jnp.sqrt(jnp.sum(att * att, axis=1, keepdims=True))
        return att / jnp.maximum(norm, 1e-12)

    diff = calc_att(s_feature) - calc_att(t_feature)
    return loss_weight * jnp.mean(diff ** 2)


if __name__ == "__main__":
    key = jax.random.PRNGKey(0)
    k1, k2, k3 = jax.random.split(key, 3)
    N, C, H, W = 2, 4, 16, 16
    s_feature = jax.random.normal(k1, (N, C, H, W), dtype=jnp.float32)
    t_feature = jax.random.normal(k2, (N, C, H, W), dtype=jnp.float32)

    loss = at_loss(s_feature, t_feature, loss_weight=1.0)
    jax.block_until_ready(loss)
    ref = at_loss_ref(s_feature, t_feature, loss_weight=1.0)
    assert jnp.allclose(loss, ref, rtol=1e-4, atol=1e-7), (loss, ref)

    # Mismatched spatial shapes -> nearest-neighbour resize path.
    t_big = jax.random.normal(k3, (N, C, 32, 32), dtype=jnp.float32)
    loss2 = at_loss(s_feature, t_big, loss_weight=0.5)
    jax.block_until_ready(loss2)
    ref2 = at_loss_ref(s_feature, t_big, loss_weight=0.5)
    assert jnp.allclose(loss2, ref2, rtol=1e-4, atol=1e-7), (loss2, ref2)

    # bf16 inputs accepted end-to-end (halves HBM traffic; f32 accumulation).
    s_bf = s_feature.astype(jnp.bfloat16)
    t_bf = t_feature.astype(jnp.bfloat16)
    loss3 = at_loss(s_bf, t_bf, loss_weight=1.0)
    jax.block_until_ready(loss3)
    ref3 = at_loss_ref(s_bf, t_bf, loss_weight=1.0)
    assert jnp.allclose(loss3, ref3, rtol=1e-3, atol=1e-6), (loss3, ref3)

    print("KERNEL_OK")
</pallas_src>

<mosaic_0001>
module attributes {stable_mosaic.version = 11 : i64} {
  func.func @_at_loss_kernel(%arg0: i32, %arg1: i32, %arg2: memref<2x4x256xf32, #tpu.memory_space<vmem>>, %arg3: memref<2x4x256xf32, #tpu.memory_space<vmem>>, %arg4: memref<1x2x1xf32, #tpu.memory_space<vmem>>, %arg5: memref<2x256xf32, #tpu.memory_space<vmem>>, %arg6: memref<2x256xf32, #tpu.memory_space<vmem>>) attributes {dimension_semantics = [#tpu.dimension_semantics<parallel>, #tpu.dimension_semantics<arbitrary>], iteration_bounds = array<i64: 1, 1>, scalar_prefetch = 0 : i64, scratch_operands = 2 : i64, tpu.core_type = #tpu.core_type<tc>, window_params = [{transform_indices = @transform_0, window_bounds = array<i64: 2, 4, 256>}, {transform_indices = @transform_1, window_bounds = array<i64: 2, 4, 256>}, {transform_indices = @transform_2, window_bounds = array<i64: 1, 2, 1>}]} {
    %c0_i32 = arith.constant 0 : i32
    %0 = arith.cmpi eq, %arg1, %c0_i32 : i32
    %1 = arith.extui %0 : i1 to i32
    %c0_i32_0 = arith.constant 0 : i32
    %2 = arith.cmpi ne, %1, %c0_i32_0 : i32
    scf.if %2 {
      %cst_17 = arith.constant 0.000000e+00 : f32
      %18 = vector.broadcast %cst_17 : f32 to vector<2x256xf32>
      %c0_18 = arith.constant 0 : index
      %c0_19 = arith.constant 0 : index
      %19 = vector.load %arg5[%c0_18, %c0_19] : memref<2x256xf32, #tpu.memory_space<vmem>>, vector<2x256xf32>
      tpu.vector_store %arg5[%c0_18, %c0_19], %18 {strides = array<i32>} : memref<2x256xf32, #tpu.memory_space<vmem>>, vector<2x256xf32>,
      %cst_20 = arith.constant 0.000000e+00 : f32
      %20 = vector.broadcast %cst_20 : f32 to vector<2x256xf32>
      %c0_21 = arith.constant 0 : index
      %c0_22 = arith.constant 0 : index
      %21 = vector.load %arg6[%c0_21, %c0_22] : memref<2x256xf32, #tpu.memory_space<vmem>>, vector<2x256xf32>
      tpu.vector_store %arg6[%c0_21, %c0_22], %20 {strides = array<i32>} : memref<2x256xf32, #tpu.memory_space<vmem>>, vector<2x256xf32>,
    } else {
    }
    %c0 = arith.constant 0 : index
    %c0_1 = arith.constant 0 : index
    %c0_2 = arith.constant 0 : index
    %3 = vector.load %arg2[%c0, %c0_1, %c0_2] : memref<2x4x256xf32, #tpu.memory_space<vmem>>, vector<2x4x256xf32>
    %c0_3 = arith.constant 0 : index
    %c0_4 = arith.constant 0 : index
    %c0_5 = arith.constant 0 : index
    %4 = vector.load %arg3[%c0_3, %c0_4, %c0_5] : memref<2x4x256xf32, #tpu.memory_space<vmem>>, vector<2x4x256xf32>
    %c0_6 = arith.constant 0 : index
    %c0_7 = arith.constant 0 : index
    %5 = vector.load %arg5[%c0_6, %c0_7] : memref<2x256xf32, #tpu.memory_space<vmem>>, vector<2x256xf32>
    %6 = arith.mulf %3, %3 : vector<2x4x256xf32>
    %cst = arith.constant dense<0.000000e+00> : vector<2x256xf32>
    %7 = vector.multi_reduction <add>, %6, %cst [1] : vector<2x4x256xf32> to vector<2x256xf32>
    %8 = arith.addf %5, %7 : vector<2x256xf32>
    %c0_8 = arith.constant 0 : index
    %c0_9 = arith.constant 0 : index
    %9 = vector.load %arg5[%c0_8, %c0_9] : memref<2x256xf32, #tpu.memory_space<vmem>>, vector<2x256xf32>
    tpu.vector_store %arg5[%c0_8, %c0_9], %8 {strides = array<i32>} : memref<2x256xf32, #tpu.memory_space<vmem>>, vector<2x256xf32>,
    %c0_10 = arith.constant 0 : index
    %c0_11 = arith.constant 0 : index
    %10 = vector.load %arg6[%c0_10, %c0_11] : memref<2x256xf32, #tpu.memory_space<vmem>>, vector<2x256xf32>
    %11 = arith.mulf %4, %4 : vector<2x4x256xf32>
    %cst_12 = arith.constant dense<0.000000e+00> : vector<2x256xf32>
    %12 = vector.multi_reduction <add>, %11, %cst_12 [1] : vector<2x4x256xf32> to vector<2x256xf32>
    %13 = arith.addf %10, %12 : vector<2x256xf32>
    %c0_13 = arith.constant 0 : index
    %c0_14 = arith.constant 0 : index
    %14 = vector.load %arg6[%c0_13, %c0_14] : memref<2x256xf32, #tpu.memory_space<vmem>>, vector<2x256xf32>
    tpu.vector_store %arg6[%c0_13, %c0_14], %13 {strides = array<i32>} : memref<2x256xf32, #tpu.memory_space<vmem>>, vector<2x256xf32>,
    %c0_i32_15 = arith.constant 0 : i32
    %15 = arith.cmpi eq, %arg1, %c0_i32_15 : i32
    %16 = arith.extui %15 : i1 to i32
    %c0_i32_16 = arith.constant 0 : i32
    %17 = arith.cmpi ne, %16, %c0_i32_16 : i32
    scf.if %17 {
      %c0_17 = arith.constant 0 : index
      %c0_18 = arith.constant 0 : index
      %18 = vector.load %arg5[%c0_17, %c0_18] : memref<2x256xf32, #tpu.memory_space<vmem>>, vector<2x256xf32>
      %cst_19 = arith.constant 2.500000e-01 : f32
      %19 = vector.broadcast %cst_19 : f32 to vector<2x256xf32>
      %20 = arith.mulf %18, %19 : vector<2x256xf32>
      %c0_20 = arith.constant 0 : index
      %c0_21 = arith.constant 0 : index
      %21 = vector.load %arg6[%c0_20, %c0_21] : memref<2x256xf32, #tpu.memory_space<vmem>>, vector<2x256xf32>
      %cst_22 = arith.constant 2.500000e-01 : f32
      %22 = vector.broadcast %cst_22 : f32 to vector<2x256xf32>
      %23 = arith.mulf %21, %22 : vector<2x256xf32>
      %24 = arith.mulf %20, %20 : vector<2x256xf32>
      %cst_23 = arith.constant dense<0.000000e+00> : vector<2xf32>
      %25 = vector.multi_reduction <add>, %24, %cst_23 [1] : vector<2x256xf32> to vector<2xf32>
      %26 = vector.shape_cast %25 : vector<2xf32> to vector<2x1xf32>
      %27 = arith.mulf %23, %23 : vector<2x256xf32>
      %cst_24 = arith.constant dense<0.000000e+00> : vector<2xf32>
      %28 = vector.multi_reduction <add>, %27, %cst_24 [1] : vector<2x256xf32> to vector<2xf32>
      %29 = vector.shape_cast %28 : vector<2xf32> to vector<2x1xf32>
      %30 = arith.mulf %20, %23 : vector<2x256xf32>
      %cst_25 = arith.constant dense<0.000000e+00> : vector<2xf32>
      %31 = vector.multi_reduction <add>, %30, %cst_25 [1] : vector<2x256xf32> to vector<2xf32>
      %32 = vector.shape_cast %31 : vector<2xf32> to vector<2x1xf32>
      %33 = math.sqrt %26 : vector<2x1xf32>
      %cst_26 = arith.constant 9.99999996E-13 : f32
      %34 = vector.broadcast %cst_26 : f32 to vector<2x1xf32>
      %35 = arith.maximumf %33, %34 : vector<2x1xf32>
      %36 = tpu.reciprocal %35 : vector<2x1xf32> -> vector<2x1xf32>
      %37 = math.sqrt %29 : vector<2x1xf32>
      %cst_27 = arith.constant 9.99999996E-13 : f32
      %38 = vector.broadcast %cst_27 : f32 to vector<2x1xf32>
      %39 = arith.maximumf %37, %38 : vector<2x1xf32>
      %40 = tpu.reciprocal %39 : vector<2x1xf32> -> vector<2x1xf32>
      %41 = arith.mulf %26, %36 : vector<2x1xf32>
      %42 = arith.mulf %41, %36 : vector<2x1xf32>
      %43 = arith.mulf %29, %40 : vector<2x1xf32>
      %44 = arith.mulf %43, %40 : vector<2x1xf32>
      %45 = arith.addf %42, %44 : vector<2x1xf32>
      %cst_28 = arith.constant 2.000000e+00 : f32
      %46 = vector.broadcast %cst_28 : f32 to vector<2x1xf32>
      %47 = arith.mulf %46, %32 : vector<2x1xf32>
      %48 = arith.mulf %47, %36 : vector<2x1xf32>
      %49 = arith.mulf %48, %40 : vector<2x1xf32>
      %50 = arith.subf %45, %49 : vector<2x1xf32>
      %51 = vector.shape_cast %50 : vector<2x1xf32> to vector<1x2x1xf32>
      %c0_29 = arith.constant 0 : index
      %c0_30 = arith.constant 0 : index
      %c0_31 = arith.constant 0 : index
      %52 = vector.load %arg4[%c0_29, %c0_30, %c0_31] : memref<1x2x1xf32, #tpu.memory_space<vmem>>, vector<1x2x1xf32>
      tpu.vector_store %arg4[%c0_29, %c0_30, %c0_31], %51 {strides = array<i32>} : memref<1x2x1xf32, #tpu.memory_space<vmem>>, vector<1x2x1xf32>,
    } else {
    }
    return
  }
  func.func @transform_0(%arg0: i32, %arg1: i32) -> (i32, i32, i32) {
    %c0_i32 = arith.constant 0 : i32
    %c0_i32_0 = arith.constant 0 : i32
    return %arg0, %arg1, %c0_i32 : i32, i32, i32
  }
  func.func @transform_1(%arg0: i32, %arg1: i32) -> (i32, i32, i32) {
    %c0_i32 = arith.constant 0 : i32
    %c0_i32_0 = arith.constant 0 : i32
    return %arg0, %arg1, %c0_i32 : i32, i32, i32
  }
  func.func @transform_2(%arg0: i32, %arg1: i32) -> (i32, i32, i32) {
    %c0_i32 = arith.constant 0 : i32
    %c0_i32_0 = arith.constant 0 : i32
    %c0_i32_1 = arith.constant 0 : i32
    return %arg0, %c0_i32, %c0_i32_0 : i32, i32, i32
  }
}

</mosaic_0001>

<llo_original>
// kernel: tpu_custom_call.1
$region0: #{tpu_custom_call.1}
  #allocation0 [shape = 'u32[]', space=smem, size = 0x4, offset = 0x4, fixed_abs, tag = 'smem constant byte address 0x4 - core index']
  #allocation1 [shape = 'u32[144,128]{1,0:T(1,128)}', space=vmem, size = 0x12000, scoped, tag = 'internal scratch']
  #allocation2 [shape = 'f32[2,256]{1,0:T(2,128)}', space=vmem, size = 0x800, scoped, tag = 'scratch operand']
  #allocation3 [shape = 'f32[2,256]{1,0:T(2,128)}', space=vmem, size = 0x800, scoped, tag = 'scratch operand']
  %s0 = inlined_call_operand.hbm [shape: f32[2,4,256], index: 0, kind: input, shape index: {}]
  %s1 = inlined_call_operand.hbm [shape: f32[2,4,256], index: 1, kind: input, shape index: {}]
  %s2 = inlined_call_operand.vmem [shape: f32[1,2,1], index: 2, kind: output, shape index: {}]
  %s3 = sld [smem:[#allocation0]]
  $region34: #{tpu_custom_call.1} parent=0
    _
  %s5 = ssub.s32 1, %s3
  %s6 = scalar_select 0, %s5, %s3
  $region1: #{tpu_custom_call.1} parent=0
    #allocation4 [shape = 'u8[8192]{0}', space=vmem, size = 0x2000, scoped, tag = 'input window, operand 0, single buffered']
    #allocation5 [shape = 's32[1]{0}', space=sflag, size = 0x4, scoped, tag = 'scoped memory for tpu_custom_call.1']
    #allocation6 [shape = 'u8[8192]{0}', space=vmem, size = 0x2000, scoped, tag = 'input window, operand 1, single buffered']
    #allocation7 [shape = 's32[1]{0}', space=sflag, size = 0x4, scoped, tag = 'scoped memory for tpu_custom_call.1']
    %7 = vsyncpa [#allocation5], 0
    %8 = vsyncpa [#allocation7], 0
    // Predicated region
    $region2: #{tpu_custom_call.1} parent=1 // pred_check
      _
    $region3: #{tpu_custom_call.1} parent=1 // pred_check_branch
      %10 = sbr.rel (0) target = $region5
    $region4: #{tpu_custom_call.1} parent=1 // pred_region
      %s12 = ssub.s32 256, 256
      %13 = vsyncadd [#allocation5], %s12
      %s14 = sshll.u32 [#allocation4], 4
      %s15 = int_to_ptr.vmem [resolvable:$true] %s14
      %20 = dma.hbm_to_vmem [thread:$0]  %s0, 256, %s15, [#allocation5], 128, 128, 8
    $region5: #{tpu_custom_call.1} parent=1 // pred_fallthru
      _
    // Predicated region
    $region6: #{tpu_custom_call.1} parent=1 // pred_check
      _
    $region7: #{tpu_custom_call.1} parent=1 // pred_check_branch
      %22 = sbr.rel (0) target = $region9
    $region8: #{tpu_custom_call.1} parent=1 // pred_region
      %s24 = ssub.s32 256, 256
      %25 = vsyncadd [#allocation7], %s24
      %s26 = sshll.u32 [#allocation6], 4
      %s27 = int_to_ptr.vmem [resolvable:$true] %s26
      %32 = dma.hbm_to_vmem [thread:$0]  %s1, 256, %s27, [#allocation7], 128, 128, 8
    $region9: #{tpu_custom_call.1} parent=1 // pred_fallthru
      _
    // Predicated region
    $region10: #{tpu_custom_call.1} parent=1 // pred_check
      _
    $region11: #{tpu_custom_call.1} parent=1 // pred_check_branch
      %34 = sbr.rel (0) target = $region13
    $region12: #{tpu_custom_call.1} parent=1 // pred_region
      %35 = dma.done [#allocation5], 256
    $region13: #{tpu_custom_call.1} parent=1 // pred_fallthru
      _
    // Predicated region
    $region14: #{tpu_custom_call.1} parent=1 // pred_check
      _
    $region15: #{tpu_custom_call.1} parent=1 // pred_check_branch
      %37 = sbr.rel (0) target = $region17
    $region16: #{tpu_custom_call.1} parent=1 // pred_region
      %38 = dma.done [#allocation7], 256
    $region17: #{tpu_custom_call.1} parent=1 // pred_fallthru
      _
    %p39 = scmp.eq.s32.totalorder 0, 0
    // Predicated region
    $region18: #{tpu_custom_call.1} parent=1 // pred_check
      %p40 = pneg %p39
    $region19: #{tpu_custom_call.1} parent=1 // pred_check_branch
      %42 = sbr.rel (%p40) target = $region21
    $region20: #{tpu_custom_call.1} parent=1 // pred_region
      %43 = vst [vmem:[#allocation2] sm:$0xf] 0.0
      %44 = vst [vmem:[#allocation3] sm:$0xf] 0.0
    $region21: #{tpu_custom_call.1} parent=1 // pred_fallthru
      _
    %v45 = vld [vmem:[#allocation4] sm:$0xff]
    %v46 = vld [vmem:[#allocation4 + $0x8] sm:$0xff]
    %v47 = vld [vmem:[#allocation6] sm:$0xff]
    %v48 = vld [vmem:[#allocation6 + $0x8] sm:$0xff]
    %v49 = vld [vmem:[#allocation2] sm:$0xf]
    %v50 = vmul.f32 %v45, %v45
    %v51 = vmul.f32 %v46, %v46
    %v54 = vcombine.high %v50, %v50
    %v55 = vcombine.high %v51, %v51
    %vm58 = vcmask 1043456
    %v59 = vsel %vm58, %v50, 0.0
    %v60 = vrot.slane %v59, 4
    %v61 = vadd.f32 %v59, %v60
    %v62 = vrot.slane %v61, 2
    %v63 = vadd.f32 %v61, %v62
    %v64 = vrot.slane %v63, 1
    %v65 = vadd.f32 %v63, %v64
    %v66 = vsel %vm58, %v54, 0.0
    %v67 = vrot.slane %v66, 4
    %v68 = vadd.f32 %v66, %v67
    %v69 = vrot.slane %v68, 2
    %v70 = vadd.f32 %v68, %v69
    %v71 = vrot.slane %v70, 1
    %v72 = vadd.f32 %v70, %v71
    %v73 = vsel %vm58, %v51, 0.0
    %v74 = vrot.slane %v73, 4
    %v75 = vadd.f32 %v73, %v74
    %v76 = vrot.slane %v75, 2
    %v77 = vadd.f32 %v75, %v76
    %v78 = vrot.slane %v77, 1
    %v79 = vadd.f32 %v77, %v78
    %v80 = vsel %vm58, %v55, 0.0
    %v81 = vrot.slane %v80, 4
    %v82 = vadd.f32 %v80, %v81
    %v83 = vrot.slane %v82, 2
    %v84 = vadd.f32 %v82, %v83
    %v85 = vrot.slane %v84, 1
    %v86 = vadd.f32 %v84, %v85
    %v91 = vcombine.low %v65, %v72
    %v93 = vunpack.c.l.s4 1983009808
    %v94 = vunpack.c.0.s8 %v93
    %v95 = vlaneseq
    %v96 = vshrl.u32 %v95, 7
    %v97 = vsub.s32 %v94, %v96
    %v98 = vrot.slane %v91, %v97
    %v99 = vcombine.low %v79, %v86
    %v101 = vunpack.c.l.s4 1983009808
    %v102 = vunpack.c.0.s8 %v101
    %v103 = vlaneseq
    %v104 = vshrl.u32 %v103, 7
    %v105 = vsub.s32 %v102, %v104
    %v106 = vrot.slane %v99, %v105
    %vm107 = vcmask 1044484
    %v108 = vsel %vm107, %v98, %v98
    %vm109 = vcmask 1046534
    %v110 = vsel %vm109, %v98, %v108
    %v111 = vrot.slane %v106, 7
    %vm112 = vcmask 1041409
    %v113 = vsel %vm112, %v111, %v110
    %vm114 = vcmask 1043459
    %v115 = vsel %vm114, %v111, %v113
    %vm116 = vcmask 1045509
    %v117 = vsel %vm116, %v111, %v115
    %vm118 = vcmask 1047559
    %v119 = vsel %vm118, %v111, %v117
    %v121 = vadd.f32 %v49, %v119
    %122 = vst [vmem:[#allocation2] sm:$0xf] %v121
    %v123 = vld [vmem:[#allocation3] sm:$0xf]
    %v124 = vmul.f32 %v47, %v47
    %v125 = vmul.f32 %v48, %v48
    %v128 = vcombine.high %v124, %v124
    %v129 = vcombine.high %v125, %v125
    %v132 = vsel %vm58, %v124, 0.0
    %v133 = vrot.slane %v132, 4
    %v134 = vadd.f32 %v132, %v133
    %v135 = vrot.slane %v134, 2
    %v136 = vadd.f32 %v134, %v135
    %v137 = vrot.slane %v136, 1
    %v138 = vadd.f32 %v136, %v137
    %v139 = vsel %vm58, %v128, 0.0
    %v140 = vrot.slane %v139, 4
    %v141 = vadd.f32 %v139, %v140
    %v142 = vrot.slane %v141, 2
    %v143 = vadd.f32 %v141, %v142
    %v144 = vrot.slane %v143, 1
    %v145 = vadd.f32 %v143, %v144
    %v146 = vsel %vm58, %v125, 0.0
    %v147 = vrot.slane %v146, 4
    %v148 = vadd.f32 %v146, %v147
    %v149 = vrot.slane %v148, 2
    %v150 = vadd.f32 %v148, %v149
    %v151 = vrot.slane %v150, 1
    %v152 = vadd.f32 %v150, %v151
    %v153 = vsel %vm58, %v129, 0.0
    %v154 = vrot.slane %v153, 4
    %v155 = vadd.f32 %v153, %v154
    %v156 = vrot.slane %v155, 2
    %v157 = vadd.f32 %v155, %v156
    %v158 = vrot.slane %v157, 1
    %v159 = vadd.f32 %v157, %v158
    %v164 = vcombine.low %v138, %v145
    %v166 = vunpack.c.l.s4 1983009808
    %v167 = vunpack.c.0.s8 %v166
    %v168 = vlaneseq
    %v169 = vshrl.u32 %v168, 7
    %v170 = vsub.s32 %v167, %v169
    %v171 = vrot.slane %v164, %v170
    %v172 = vcombine.low %v152, %v159
    %v174 = vunpack.c.l.s4 1983009808
    %v175 = vunpack.c.0.s8 %v174
    %v176 = vlaneseq
    %v177 = vshrl.u32 %v176, 7
    %v178 = vsub.s32 %v175, %v177
    %v179 = vrot.slane %v172, %v178
    %v180 = vsel %vm107, %v171, %v171
    %v181 = vsel %vm109, %v171, %v180
    %v182 = vrot.slane %v179, 7
    %v183 = vsel %vm112, %v182, %v181
    %v184 = vsel %vm114, %v182, %v183
    %v185 = vsel %vm116, %v182, %v184
    %v186 = vsel %vm118, %v182, %v185
    %v188 = vadd.f32 %v123, %v186
    %189 = vst [vmem:[#allocation3] sm:$0xf] %v188
    // Predicated region
    $region22: #{tpu_custom_call.1} parent=1 // pred_check
      %p190 = pneg %p39
    $region23: #{tpu_custom_call.1} parent=1 // pred_check_branch
      %192 = sbr.rel (%p190) target = $region25
    $region24: #{tpu_custom_call.1} parent=1 // pred_region
      %v193 = vld [vmem:[#allocation2] sm:$0xf]
      %v194 = vmul.f32 %v193, 0.25
      %v195 = vld [vmem:[#allocation3] sm:$0xf]
      %v196 = vmul.f32 %v195, 0.25
      %v197 = vmul.f32 %v194, %v194
      %v200 = vunpack.c.l.s4 1983009808
      %v201 = vunpack.c.0.s8 %v200
      %v202 = vlaneseq
      %v203 = vshrl.u32 %v202, 7
      %v204 = vsub.s32 %v201, %v203
      %v205 = vrot.slane %v197, %v204
      %v206 = vcombine.high %v205, %v205
      %vm209 = vcmask 1041408
      %v210 = vsel %vm209, %v205, 0.0
      %v211 = vsel %vm209, %v206, 0.0
      %v212 = vadd.f32 %v210, %v211
      %213 = vadd.xlane.f32.xlu0 %v212
      %v214 = vpop.xlane.xlu0 %213
      %v215 = vmul.f32 %v196, %v196
      %v218 = vunpack.c.l.s4 1983009808
      %v219 = vunpack.c.0.s8 %v218
      %v220 = vlaneseq
      %v221 = vshrl.u32 %v220, 7
      %v222 = vsub.s32 %v219, %v221
      %v223 = vrot.slane %v215, %v222
      %v224 = vcombine.high %v223, %v223
      %v227 = vsel %vm209, %v223, 0.0
      %v228 = vsel %vm209, %v224, 0.0
      %v229 = vadd.f32 %v227, %v228
      %230 = vadd.xlane.f32.xlu0 %v229
      %v231 = vpop.xlane.xlu0 %230
      %v232 = vmul.f32 %v194, %v196
      %v235 = vunpack.c.l.s4 1983009808
      %v236 = vunpack.c.0.s8 %v235
      %v237 = vlaneseq
      %v238 = vshrl.u32 %v237, 7
      %v239 = vsub.s32 %v236, %v238
      %v240 = vrot.slane %v232, %v239
      %v241 = vcombine.high %v240, %v240
      %v244 = vsel %vm209, %v240, 0.0
      %v245 = vsel %vm209, %v241, 0.0
      %v246 = vadd.f32 %v244, %v245
      %247 = vadd.xlane.f32.xlu0 %v246
      %v248 = vpop.xlane.xlu0 %247
      %v249 = vrsqrt.pop %v214
      %v250 = vmul.f32 %v214, %v249
      %vm251 = vcmp.eq.f32.partialorder %v214, inf
      %v252 = vsel %vm251, %v214, %v250
      %vm253 = vcmp.eq.f32.partialorder %v214, 0.0
      %v254 = vand.u32 %v214, 2147483648
      %v255 = vsel %vm253, %v254, %v252
      %v256 = vmax.f32 %v255, 1e-12
      %v257 = vrcp.pop %v256
      %v258 = vrsqrt.pop %v231
      %v259 = vmul.f32 %v231, %v258
      %vm260 = vcmp.eq.f32.partialorder %v231, inf
      %v261 = vsel %vm260, %v231, %v259
      %vm262 = vcmp.eq.f32.partialorder %v231, 0.0
      %v263 = vand.u32 %v231, 2147483648
      %v264 = vsel %vm262, %v263, %v261
      %v265 = vmax.f32 %v264, 1e-12
      %v266 = vrcp.pop %v265
      %v267 = vmul.f32 %v214, %v257
      %v268 = vmul.f32 %v267, %v257
      %v269 = vmul.f32 %v231, %v266
      %v270 = vmul.f32 %v269, %v266
      %v271 = vadd.f32 %v268, %v270
      %v272 = vmul.f32 %v248, 2.0
      %v273 = vmul.f32 %v272, %v257
      %v274 = vmul.f32 %v273, %v266
      %v275 = vsub.f32 %v271, %v274
      %vm276 = vcmask 1024
      %277 = vst.msk [vmem:[%s2] sm:$0x3] %vm276, %v275
    $region25: #{tpu_custom_call.1} parent=1 // pred_fallthru
      _
    // Predicated region
    $region26: #{tpu_custom_call.1} parent=1 // pred_check
      _
    $region27: #{tpu_custom_call.1} parent=1 // pred_check_branch
      %279 = sbr.rel (0) target = $region29
    $region28: #{tpu_custom_call.1} parent=1 // pred_region
      _
    $region29: #{tpu_custom_call.1} parent=1 // pred_fallthru
      _
    // Predicated region
    $region30: #{tpu_custom_call.1} parent=1 // pred_check
      _
    $region31: #{tpu_custom_call.1} parent=1 // pred_check_branch
      %281 = sbr.rel (0) target = $region33
    $region32: #{tpu_custom_call.1} parent=1 // pred_region
      _
    $region33: #{tpu_custom_call.1} parent=1 // pred_fallthru
      _
    %282 = vsyncpa [#allocation5], 1
    %283 = vsyncpa [#allocation7], 1

</llo_original>
